<compile_context>
chip_gen: v6e
topology: v6e:2x2x1
jax: 0.10.0
libtpu: 0.0.40
codegen_flags: <defaults>
</compile_context>

<pallas_src>
import functools

import jax
import jax.numpy as jnp
from jax.experimental import pallas as pl
from jax.experimental.pallas import tpu as pltpu

_LANE = 512                 # lane-dense last dim (multiple of 128)
_MAX_BLOCK_ROWS = 1024      # 1024 x 512 f32 = 2 MiB per buffer
_MIN_PALLAS_BYTES = 1 << 20  # below this, plain jnp.where is already optimal


def _round_up(n: int, m: int) -> int:
    return ((n + m - 1) // m) * m


def _binarize_kernel(x_ref, o_ref, *, threshold, value_on_positive,
                     value_on_negative):
    # Compare in f32 (handles integer inputs / fractional thresholds too),
    # pure VPU compare + select.
    x = x_ref[...].astype(jnp.float32)
    o_ref[...] = jnp.where(
        x > jnp.float32(threshold),
        jnp.float32(value_on_positive),
        jnp.float32(value_on_negative),
    ).astype(o_ref.dtype)


def binarize(sample: jax.Array,
             threshold: float = 100.0,
             value_on_positive: float = 1.0,
             value_on_negative: float = 0.0,
             *,
             out_dtype=jnp.float32,
             force_pallas: bool = False) -> jax.Array:
    """Elementwise binarization: where(sample > threshold, on_pos, on_neg)."""
    total = sample.size
    in_bytes = total * sample.dtype.itemsize

    # Fast path: for tiny inputs the pallas_call fixed overhead dominates.
    if not force_pallas and in_bytes < _MIN_PALLAS_BYTES:
        return jnp.where(sample > threshold,
                         value_on_positive, value_on_negative).astype(out_dtype)

    # ---- lane-dense 2D re-tiling -------------------------------------------
    rows_needed = pl.cdiv(total, _LANE)
    block_rows = min(_MAX_BLOCK_ROWS, _round_up(rows_needed, 8))
    padded_rows = _round_up(rows_needed, block_rows)
    padded_total = padded_rows * _LANE

    x_flat = sample.reshape(-1)
    if padded_total != total:
        x_flat = jnp.pad(x_flat, (0, padded_total - total))
    x2d = x_flat.reshape(padded_rows, _LANE)

    grid = padded_rows // block_rows
    out_itemsize = jnp.dtype(out_dtype).itemsize

    kernel = functools.partial(
        _binarize_kernel,
        threshold=threshold,
        value_on_positive=value_on_positive,
        value_on_negative=value_on_negative,
    )

    out2d = pl.pallas_call(
        kernel,
        out_shape=jax.ShapeDtypeStruct((padded_rows, _LANE), out_dtype),
        grid_spec=pltpu.PrefetchScalarGridSpec(
            num_scalar_prefetch=0,
            grid=(grid,),
            in_specs=[pl.BlockSpec((block_rows, _LANE), lambda i: (i, 0))],
            out_specs=pl.BlockSpec((block_rows, _LANE), lambda i: (i, 0)),
        ),
        compiler_params=pltpu.CompilerParams(
            dimension_semantics=("parallel",)),
        cost_estimate=pl.CostEstimate(
            flops=padded_total,
            transcendentals=0,
            bytes_accessed=padded_total * (x2d.dtype.itemsize + out_itemsize)),
    )(x2d)

    return out2d.reshape(-1)[:total].reshape(sample.shape)


if __name__ == "__main__":
    key = jax.random.PRNGKey(0)
    # Small image-like input; values span around the threshold (100) so both
    # branches of the select are exercised.
    x = jax.random.uniform(key, (2, 4, 16, 16), dtype=jnp.float32,
                           minval=0.0, maxval=255.0)
    ref = jnp.where(x > 100.0, 1.0, 0.0).astype(jnp.float32)

    # Force the Pallas path (the test input is tiny and would otherwise take
    # the fast path).
    out = binarize(x, threshold=100.0, value_on_positive=1.0,
                   value_on_negative=0.0, force_pallas=True)
    out = jax.block_until_ready(out)
    assert out.shape == x.shape and out.dtype == jnp.float32
    assert bool(jnp.all(out == ref))

    # Default path for tiny inputs (pure jnp fast path).
    out_fast = jax.block_until_ready(binarize(x))
    assert bool(jnp.all(out_fast == ref))

    # A slightly larger, non-divisible shape to exercise padding and a
    # multi-step grid (2 tiles of 1024x512).
    x2 = jax.random.uniform(jax.random.PRNGKey(0), (2, 4, 300, 300),
                            dtype=jnp.float32, minval=0.0, maxval=255.0)
    out2 = jax.block_until_ready(binarize(x2, force_pallas=True))
    ref2 = jnp.where(x2 > 100.0, 1.0, 0.0).astype(jnp.float32)
    assert out2.shape == x2.shape
    assert bool(jnp.all(out2 == ref2))

    print("KERNEL_OK")
</pallas_src>

<mosaic_0001>
module attributes {stable_mosaic.version = 11 : i64} {
  func.func @_binarize_kernel(%arg0: i32, %arg1: memref<8x512xf32, #tpu.memory_space<vmem>>, %arg2: memref<8x512xf32, #tpu.memory_space<vmem>>) attributes {dimension_semantics = [#tpu.dimension_semantics<parallel>], iteration_bounds = array<i64: 1>, scalar_prefetch = 0 : i64, scratch_operands = 0 : i64, tpu.core_type = #tpu.core_type<tc>, window_params = [{transform_indices = @transform_0, window_bounds = array<i64: 8, 512>}, {transform_indices = @transform_1, window_bounds = array<i64: 8, 512>}]} {
    %c0 = arith.constant 0 : index
    %c0_0 = arith.constant 0 : index
    %0 = vector.load %arg1[%c0, %c0_0] : memref<8x512xf32, #tpu.memory_space<vmem>>, vector<8x512xf32>
    %cst = arith.constant 1.000000e+02 : f32
    %1 = vector.broadcast %cst : f32 to vector<8x512xf32>
    %2 = arith.cmpf ogt, %0, %1 : vector<8x512xf32>
    %cst_1 = arith.constant 1.000000e+00 : f32
    %cst_2 = arith.constant 0.000000e+00 : f32
    %3 = vector.broadcast %cst_1 : f32 to vector<8x512xf32>
    %4 = vector.broadcast %cst_2 : f32 to vector<8x512xf32>
    %5 = arith.select %2, %3, %4 : vector<8x512xi1>, vector<8x512xf32>
    %c0_3 = arith.constant 0 : index
    %c0_4 = arith.constant 0 : index
    %6 = vector.load %arg2[%c0_3, %c0_4] : memref<8x512xf32, #tpu.memory_space<vmem>>, vector<8x512xf32>
    tpu.vector_store %arg2[%c0_3, %c0_4], %5 {strides = array<i32>} : memref<8x512xf32, #tpu.memory_space<vmem>>, vector<8x512xf32>,
    return
  }
  func.func @transform_0(%arg0: i32) -> (i32, i32) {
    %c0_i32 = arith.constant 0 : i32
    %c0_i32_0 = arith.constant 0 : i32
    return %arg0, %c0_i32 : i32, i32
  }
  func.func @transform_1(%arg0: i32) -> (i32, i32) {
    %c0_i32 = arith.constant 0 : i32
    %c0_i32_0 = arith.constant 0 : i32
    return %arg0, %c0_i32 : i32, i32
  }
}

</mosaic_0001>

<llo_original>
// kernel: tpu_custom_call.1
$region0: #{tpu_custom_call.1}
  #allocation0 [shape = 'u32[]', space=smem, size = 0x4, offset = 0x4, fixed_abs, tag = 'smem constant byte address 0x4 - core index']
  #allocation1 [shape = 'u32[144,128]{1,0:T(1,128)}', space=vmem, size = 0x12000, scoped, tag = 'internal scratch']
  %s0 = inlined_call_operand.hbm [shape: f32[8,512], index: 0, kind: input, shape index: {}]
  %s1 = inlined_call_operand.hbm [shape: f32[8,512], index: 1, kind: output, shape index: {}]
  %s2 = sld [smem:[#allocation0]]
  $region18: #{tpu_custom_call.1} parent=0
    _
  %s4 = ssub.s32 1, %s2
  %s5 = scalar_select 0, %s4, %s2
  $region1: #{tpu_custom_call.1} parent=0
    #allocation2 [shape = 'u8[16384]{0}', space=vmem, size = 0x4000, scoped, tag = 'input window, operand 0, single buffered']
    #allocation3 [shape = 's32[1]{0}', space=sflag, size = 0x4, scoped, tag = 'scoped memory for tpu_custom_call.1']
    #allocation4 [shape = 's32[1]{0}', space=sflag, size = 0x4, scoped, tag = 'scoped memory for tpu_custom_call.1']
    #allocation5 [shape = 'u8[16384]{0}', space=vmem, size = 0x4000, scoped, tag = 'output window, operand 0, single buffered']
    %6 = vsyncpa [#allocation3], 0
    %7 = vsyncpa [#allocation4], 0
    // Predicated region
    $region2: #{tpu_custom_call.1} parent=1 // pred_check
      _
    $region3: #{tpu_custom_call.1} parent=1 // pred_check_branch
      %9 = sbr.rel (0) target = $region5
    $region4: #{tpu_custom_call.1} parent=1 // pred_region
      %s11 = ssub.s32 512, 512
      %12 = vsyncadd [#allocation3], %s11
      %s14 = sshll.u32 [#allocation2], 4
      %s15 = int_to_ptr.vmem [resolvable:$true] %s14
      %17 = dma.hbm_to_vmem [thread:$0]  %s0, 512, %s15, [#allocation3]
    $region5: #{tpu_custom_call.1} parent=1 // pred_fallthru
      _
    // Predicated region
    $region6: #{tpu_custom_call.1} parent=1 // pred_check
      _
    $region7: #{tpu_custom_call.1} parent=1 // pred_check_branch
      %19 = sbr.rel (0) target = $region9
    $region8: #{tpu_custom_call.1} parent=1 // pred_region
      %20 = dma.done [#allocation3], 512
    $region9: #{tpu_custom_call.1} parent=1 // pred_fallthru
      _
    %v21 = vld [vmem:[#allocation2] sm:$0xff]
    %v22 = vld [vmem:[#allocation2 + $0x8] sm:$0xff]
    %v23 = vld [vmem:[#allocation2 + $0x10] sm:$0xff]
    %v24 = vld [vmem:[#allocation2 + $0x18] sm:$0xff]
    %vm25 = vcmp.gt.f32.partialorder %v21, 100.0
    %vm26 = vcmp.gt.f32.partialorder %v22, 100.0
    %vm27 = vcmp.gt.f32.partialorder %v23, 100.0
    %vm28 = vcmp.gt.f32.partialorder %v24, 100.0
    %v29 = vsel %vm25, 1.0, 0.0
    %v30 = vsel %vm26, 1.0, 0.0
    %v31 = vsel %vm27, 1.0, 0.0
    %v32 = vsel %vm28, 1.0, 0.0
    %33 = vst [vmem:[#allocation5] sm:$0xff] %v29
    %34 = vst [vmem:[#allocation5 + $0x8] sm:$0xff] %v30
    %35 = vst [vmem:[#allocation5 + $0x10] sm:$0xff] %v31
    %36 = vst [vmem:[#allocation5 + $0x18] sm:$0xff] %v32
    // Predicated region
    $region10: #{tpu_custom_call.1} parent=1 // pred_check
      _
    $region11: #{tpu_custom_call.1} parent=1 // pred_check_branch
      %38 = sbr.rel (0) target = $region13
    $region12: #{tpu_custom_call.1} parent=1 // pred_region
      %s40 = ssub.s32 512, 512
      %41 = vsyncadd [#allocation4], %s40
      %s43 = sshll.u32 [#allocation5], 4
      %s44 = int_to_ptr.vmem [resolvable:$true] %s43
      %46 = dma.vmem_to_hbm [thread:$0]  %s44, 512, %s1, [#allocation4]
    $region13: #{tpu_custom_call.1} parent=1 // pred_fallthru
      _
    // Predicated region
    $region14: #{tpu_custom_call.1} parent=1 // pred_check
      _
    $region15: #{tpu_custom_call.1} parent=1 // pred_check_branch
      %48 = sbr.rel (0) target = $region17
    $region16: #{tpu_custom_call.1} parent=1 // pred_region
      %49 = dma.done [#allocation4], 512
    $region17: #{tpu_custom_call.1} parent=1 // pred_fallthru
      _
    %50 = vsyncpa [#allocation3], 1
    %51 = vsyncpa [#allocation4], 1

</llo_original>
